<compile_context>
chip_gen: v6e
topology: v6e:2x2x1
jax: 0.10.0
libtpu: 0.0.40
codegen_flags: <defaults>
</compile_context>

<pallas_src>
import jax
import jax.numpy as jnp
from jax import lax
from jax.experimental import pallas as pl
from jax.experimental.pallas import tpu as pltpu


TILE_B_MAX = 4096  # ~2.5 MiB of blocks+intermediates at 4096 rows: far under scoped VMEM.


def _cdiv(a: int, b: int) -> int:
    return (a + b - 1) // b


def _round_up(n: int, m: int) -> int:
    return ((n + m - 1) // m) * m


def _mlp_kernel(x_ref, w1_ref, b1_ref, w2_ref, b2_ref, w3_ref, b3_ref, o_ref):
    # fc1 + relu: bf16 MXU matmul, f32 accumulation, f32 epilogue.
    h1 = jnp.dot(x_ref[...], w1_ref[...], preferred_element_type=jnp.float32)
    h1 = jnp.maximum(h1 + b1_ref[...], 0.0)
    # fc2 + relu.
    h2 = jnp.dot(h1.astype(jnp.bfloat16), w2_ref[...],
                 preferred_element_type=jnp.float32)
    h2 = jnp.maximum(h2 + b2_ref[...], 0.0)
    # fc3: single output column. Contract w3 (1, 32) against h2's feature dim
    # (the q@k.T / 'od,bd->ob' form) so the result is directly a lane-dense
    # (1, tile_b) row -> unmasked contiguous stores. MXU has huge slack here,
    # so this one extra tiny matmul is free; it avoids a sublane->lane
    # relayout of a (tile_b, 1) column.
    row = lax.dot_general(
        w3_ref[...], h2.astype(jnp.bfloat16),
        dimension_numbers=(((1,), (1,)), ((), ())),
        preferred_element_type=jnp.float32,
    )                                              # (1, tile_b)
    o_ref[0] = (row + b3_ref[0, 0]).astype(o_ref.dtype)


def house_price_forward(x, params, *, tile_b_max: int = TILE_B_MAX):
    """x: (B, input_size). params: dict of w1,b1,w2,b2,w3,b3. Returns (B, 1) f32."""
    B, F = x.shape

    # bf16 inputs for the MXU (accumulation stays f32 in-kernel). Casting x
    # here is a no-op if the caller already streams bf16 from HBM (preferred:
    # that is what actually halves the dominant x HBM traffic).
    x = x.astype(jnp.bfloat16)
    w1 = params["w1"].astype(jnp.bfloat16)
    w2 = params["w2"].astype(jnp.bfloat16)
    w3 = params["w3"].astype(jnp.bfloat16)
    b1 = params["b1"].astype(jnp.float32)
    b2 = params["b2"].astype(jnp.float32)
    b3 = params["b3"].astype(jnp.float32)

    # Batch tile: large (amortizes ~0.35us fixed per-grid-step cost), but aim
    # for >=2 grid steps so the "parallel" axis can still split across v7x's
    # two TensorCores; multiple of 16 for bf16 sublane packing.
    tile_b = min(tile_b_max, _round_up(max(_cdiv(B, 2), 16), 16))

    if B < tile_b:
        # Tiny batch: pad a small tail so a full block exists (cheap).
        x = jnp.pad(x, ((0, tile_b - B), (0, 0)))
    # For large, non-tile-multiple B we deliberately do NOT jnp.pad x (that
    # would rewrite the whole dominant HBM stream); the last grid step reads a
    # partial block and its garbage tail rows are sliced off below.
    num_tiles = _cdiv(max(B, tile_b), tile_b)

    # Weights / biases: full-array blocks with constant index_maps -> fetched
    # once, VMEM-resident across all grid steps.
    def _const_spec(a):
        nd = a.ndim
        return pl.BlockSpec(a.shape, lambda i, nd=nd: (0,) * nd)

    flops = 2 * B * (F * 64 + 64 * 32 + 32 * 1)
    bytes_accessed = int(
        x.size * x.dtype.itemsize
        + num_tiles * tile_b * 4
        + sum(a.size * a.dtype.itemsize for a in (w1, b1, w2, b2, w3, b3))
    )

    out = pl.pallas_call(
        _mlp_kernel,
        out_shape=jax.ShapeDtypeStruct((num_tiles, 1, tile_b), jnp.float32),
        grid=(num_tiles,),
        in_specs=[
            pl.BlockSpec((tile_b, F), lambda i: (i, 0)),          # x: batch-tiled
            _const_spec(w1),
            _const_spec(b1),
            _const_spec(w2),
            _const_spec(b2),
            _const_spec(w3),
            pl.BlockSpec(memory_space=pltpu.MemorySpace.SMEM),    # b3 scalar
        ],
        out_specs=pl.BlockSpec((1, 1, tile_b), lambda i: (i, 0, 0)),
        compiler_params=pltpu.CompilerParams(
            dimension_semantics=("parallel",),  # v7x: shard batch tiles across 2 TCs
        ),
        cost_estimate=pl.CostEstimate(
            flops=flops, transcendentals=0, bytes_accessed=bytes_accessed),
    )(x, w1, b1, w2, b2, w3, b3)

    # Lane-dense (num_tiles, 1, tile_b) rows -> (B, 1) column.
    return out.reshape(num_tiles * tile_b)[:B].reshape(B, 1)


def init_params(key, input_size):
    """Deterministic init matching the layer shapes of HousePriceModel."""
    k1, k2, k3, k4, k5, k6 = jax.random.split(key, 6)
    # fc1/fc2 stored as (in, out); biases as (1, out); fc3 weight as a (1, 32)
    # row vector (torch (out, in) layout); b3 as a (1, 1) SMEM scalar.
    w1 = jax.random.normal(k1, (input_size, 64), jnp.float32) * 0.1
    b1 = jax.random.normal(k2, (1, 64), jnp.float32) * 0.1
    w2 = jax.random.normal(k3, (64, 32), jnp.float32) * 0.1
    b2 = jax.random.normal(k4, (1, 32), jnp.float32) * 0.1
    w3 = jax.random.normal(k5, (1, 32), jnp.float32) * 0.1
    b3 = jax.random.normal(k6, (1, 1), jnp.float32) * 0.1
    return dict(w1=w1, b1=b1, w2=w2, b2=b2, w3=w3, b3=b3)


def _reference_f32(x, p):
    h1 = jnp.maximum(x @ p["w1"] + p["b1"], 0.0)
    h2 = jnp.maximum(h1 @ p["w2"] + p["b2"], 0.0)
    return h2 @ p["w3"].T + p["b3"]


def _reference_bf16(x, p):
    """Mirrors the kernel's bf16-input / f32-accumulate arithmetic."""
    xb = x.astype(jnp.bfloat16)
    w1 = p["w1"].astype(jnp.bfloat16)
    w2 = p["w2"].astype(jnp.bfloat16)
    w3 = p["w3"].astype(jnp.bfloat16)
    h1 = jnp.maximum(
        jnp.dot(xb, w1, preferred_element_type=jnp.float32) + p["b1"], 0.0)
    h2 = jnp.maximum(
        jnp.dot(h1.astype(jnp.bfloat16), w2,
                preferred_element_type=jnp.float32) + p["b2"], 0.0)
    return jnp.dot(h2.astype(jnp.bfloat16), w3.T,
                   preferred_element_type=jnp.float32) + p["b3"]


if __name__ == "__main__":
    key = jax.random.PRNGKey(0)
    k_x, k_p, k_x2 = jax.random.split(key, 3)

    batch, input_size = 8, 16
    x = jax.random.normal(k_x, (batch, input_size), jnp.float32)
    params = init_params(k_p, input_size)

    fwd = jax.jit(house_price_forward)

    # Small demo batch (single padded tile).
    out = jax.block_until_ready(fwd(x, params))
    assert out.shape == (batch, 1), out.shape
    assert jnp.allclose(out, _reference_bf16(x, params), atol=1e-3, rtol=1e-3), \
        "mismatch vs bf16-matched reference (small batch)"
    assert jnp.allclose(out, _reference_f32(x, params), atol=5e-2, rtol=5e-2), \
        "mismatch vs f32 reference (small batch)"

    # Larger batch: multi-tile grid (>=2 steps) + un-padded partial last block.
    big_batch = 1000
    x2 = jax.random.normal(k_x2, (big_batch, input_size), jnp.float32)
    out2 = jax.block_until_ready(fwd(x2, params))
    assert out2.shape == (big_batch, 1), out2.shape
    assert jnp.allclose(out2, _reference_bf16(x2, params), atol=1e-3, rtol=1e-3), \
        "mismatch vs bf16-matched reference (big batch)"

    print("KERNEL_OK")
</pallas_src>

<mosaic_0001>
module attributes {stable_mosaic.version = 11 : i64} {
  func.func @_mlp_kernel(%arg0: i32, %arg1: memref<16x16xbf16, #tpu.memory_space<vmem>>, %arg2: memref<16x64xbf16, #tpu.memory_space<vmem>>, %arg3: memref<1x64xf32, #tpu.memory_space<vmem>>, %arg4: memref<64x32xbf16, #tpu.memory_space<vmem>>, %arg5: memref<1x32xf32, #tpu.memory_space<vmem>>, %arg6: memref<1x32xbf16, #tpu.memory_space<vmem>>, %arg7: memref<1x1xf32, #tpu.memory_space<smem>>, %arg8: memref<1x1x16xf32, #tpu.memory_space<vmem>>) attributes {dimension_semantics = [#tpu.dimension_semantics<parallel>], iteration_bounds = array<i64: 1>, scalar_prefetch = 0 : i64, scratch_operands = 0 : i64, tpu.core_type = #tpu.core_type<tc>, window_params = [{transform_indices = @transform_0, window_bounds = array<i64: 16, 16>}, {pipeline_mode = #tpu.pipeline_mode<synchronous>, transform_indices = @transform_1, window_bounds = array<i64: 16, 64>}, {pipeline_mode = #tpu.pipeline_mode<synchronous>, transform_indices = @transform_2, window_bounds = array<i64: 1, 64>}, {pipeline_mode = #tpu.pipeline_mode<synchronous>, transform_indices = @transform_3, window_bounds = array<i64: 64, 32>}, {pipeline_mode = #tpu.pipeline_mode<synchronous>, transform_indices = @transform_4, window_bounds = array<i64: 1, 32>}, {pipeline_mode = #tpu.pipeline_mode<synchronous>, transform_indices = @transform_5, window_bounds = array<i64: 1, 32>}, {transform_indices = @transform_6, window_bounds = array<i64: 1, 1>}, {transform_indices = @transform_7, window_bounds = array<i64: 1, 1, 16>}]} {
    %c0 = arith.constant 0 : index
    %c0_0 = arith.constant 0 : index
    %0 = vector.load %arg1[%c0, %c0_0] : memref<16x16xbf16, #tpu.memory_space<vmem>>, vector<16x16xbf16>
    %c0_1 = arith.constant 0 : index
    %c0_2 = arith.constant 0 : index
    %1 = vector.load %arg2[%c0_1, %c0_2] : memref<16x64xbf16, #tpu.memory_space<vmem>>, vector<16x64xbf16>
    %cst = arith.constant dense<0.000000e+00> : vector<16x64xf32>
    %2 = tpu.matmul %0, %1, %cst {dimension_numbers = #tpu.dot_dimension_numbers<[1], [0], [0], [1], [0, 0, 1, 1], [], []>} : vector<16x16xbf16>, vector<16x64xbf16>, vector<16x64xf32> -> vector<16x64xf32>
    %c0_3 = arith.constant 0 : index
    %c0_4 = arith.constant 0 : index
    %3 = vector.load %arg3[%c0_3, %c0_4] : memref<1x64xf32, #tpu.memory_space<vmem>>, vector<1x64xf32>
    %4 = vector.broadcast %3 : vector<1x64xf32> to vector<16x64xf32>
    %5 = arith.addf %2, %4 : vector<16x64xf32>
    %cst_5 = arith.constant 0.000000e+00 : f32
    %6 = vector.broadcast %cst_5 : f32 to vector<16x64xf32>
    %7 = arith.maximumf %5, %6 : vector<16x64xf32>
    %8 = arith.truncf %7 : vector<16x64xf32> to vector<16x64xbf16>
    %c0_6 = arith.constant 0 : index
    %c0_7 = arith.constant 0 : index
    %9 = vector.load %arg4[%c0_6, %c0_7] : memref<64x32xbf16, #tpu.memory_space<vmem>>, vector<64x32xbf16>
    %cst_8 = arith.constant dense<0.000000e+00> : vector<16x32xf32>
    %10 = tpu.matmul %8, %9, %cst_8 {dimension_numbers = #tpu.dot_dimension_numbers<[1], [0], [0], [1], [0, 0, 1, 1], [], []>} : vector<16x64xbf16>, vector<64x32xbf16>, vector<16x32xf32> -> vector<16x32xf32>
    %c0_9 = arith.constant 0 : index
    %c0_10 = arith.constant 0 : index
    %11 = vector.load %arg5[%c0_9, %c0_10] : memref<1x32xf32, #tpu.memory_space<vmem>>, vector<1x32xf32>
    %12 = vector.broadcast %11 : vector<1x32xf32> to vector<16x32xf32>
    %13 = arith.addf %10, %12 : vector<16x32xf32>
    %cst_11 = arith.constant 0.000000e+00 : f32
    %14 = vector.broadcast %cst_11 : f32 to vector<16x32xf32>
    %15 = arith.maximumf %13, %14 : vector<16x32xf32>
    %c0_12 = arith.constant 0 : index
    %c0_13 = arith.constant 0 : index
    %16 = vector.load %arg6[%c0_12, %c0_13] : memref<1x32xbf16, #tpu.memory_space<vmem>>, vector<1x32xbf16>
    %17 = arith.truncf %15 : vector<16x32xf32> to vector<16x32xbf16>
    %cst_14 = arith.constant dense<0.000000e+00> : vector<1x16xf32>
    %18 = tpu.matmul %16, %17, %cst_14 {dimension_numbers = #tpu.dot_dimension_numbers<[1], [1], [0], [0], [0, 0, 1, 0], [], []>} : vector<1x32xbf16>, vector<16x32xbf16>, vector<1x16xf32> -> vector<1x16xf32>
    %c0_15 = arith.constant 0 : index
    %c0_16 = arith.constant 0 : index
    %19 = memref.load %arg7[%c0_15, %c0_16] : memref<1x1xf32, #tpu.memory_space<smem>>
    %20 = vector.broadcast %19 : f32 to vector<1x16xf32>
    %21 = arith.addf %18, %20 : vector<1x16xf32>
    %c0_17 = arith.constant 0 : index
    %c0_18 = arith.constant 0 : index
    %c0_19 = arith.constant 0 : index
    %22 = vector.load %arg8[%c0_17, %c0_18, %c0_19] : memref<1x1x16xf32, #tpu.memory_space<vmem>>, vector<1x1x16xf32>
    %23 = vector.shape_cast %22 : vector<1x1x16xf32> to vector<1x16xf32>
    %24 = vector.shape_cast %21 : vector<1x16xf32> to vector<1x1x16xf32>
    tpu.vector_store %arg8[%c0_17, %c0_18, %c0_19], %24 {strides = array<i32>} : memref<1x1x16xf32, #tpu.memory_space<vmem>>, vector<1x1x16xf32>,
    return
  }
  func.func @transform_0(%arg0: i32) -> (i32, i32) {
    %c0_i32 = arith.constant 0 : i32
    %c0_i32_0 = arith.constant 0 : i32
    return %arg0, %c0_i32 : i32, i32
  }
  func.func @transform_1(%arg0: i32) -> (i32, i32) {
    %c0_i32 = arith.constant 0 : i32
    %c0_i32_0 = arith.constant 0 : i32
    %c0_i32_1 = arith.constant 0 : i32
    return %c0_i32, %c0_i32_0 : i32, i32
  }
  func.func @transform_2(%arg0: i32) -> (i32, i32) {
    %c0_i32 = arith.constant 0 : i32
    %c0_i32_0 = arith.constant 0 : i32
    %c0_i32_1 = arith.constant 0 : i32
    return %c0_i32, %c0_i32_0 : i32, i32
  }
  func.func @transform_3(%arg0: i32) -> (i32, i32) {
    %c0_i32 = arith.constant 0 : i32
    %c0_i32_0 = arith.constant 0 : i32
    %c0_i32_1 = arith.constant 0 : i32
    return %c0_i32, %c0_i32_0 : i32, i32
  }
  func.func @transform_4(%arg0: i32) -> (i32, i32) {
    %c0_i32 = arith.constant 0 : i32
    %c0_i32_0 = arith.constant 0 : i32
    %c0_i32_1 = arith.constant 0 : i32
    return %c0_i32, %c0_i32_0 : i32, i32
  }
  func.func @transform_5(%arg0: i32) -> (i32, i32) {
    %c0_i32 = arith.constant 0 : i32
    %c0_i32_0 = arith.constant 0 : i32
    %c0_i32_1 = arith.constant 0 : i32
    return %c0_i32, %c0_i32_0 : i32, i32
  }
  func.func @transform_6(%arg0: i32) -> (i32, i32) {
    %c0_i32 = arith.constant 0 : i32
    %c0_i32_0 = arith.constant 0 : i32
    %c0_i32_1 = arith.constant 0 : i32
    return %c0_i32, %c0_i32_0 : i32, i32
  }
  func.func @transform_7(%arg0: i32) -> (i32, i32, i32) {
    %c0_i32 = arith.constant 0 : i32
    %c0_i32_0 = arith.constant 0 : i32
    %c0_i32_1 = arith.constant 0 : i32
    return %arg0, %c0_i32, %c0_i32_0 : i32, i32, i32
  }
}

</mosaic_0001>

<llo_original>
// kernel: house_price_forward.1
$region0: #{house_price_forward.1}
  #allocation0 [shape = 'u32[]', space=smem, size = 0x4, offset = 0x4, fixed_abs, tag = 'smem constant byte address 0x4 - core index']
  #allocation1 [shape = 'u32[144,128]{1,0:T(1,128)}', space=vmem, size = 0x12000, scoped, tag = 'internal scratch']
  #allocation2 [shape = 'f32[1,1]{1,0:T(1,128)S(6)}', space=smem, size = 0x200, scoped, tag = 'scoped memory for house_price_forward.1']
  %s0 = inlined_call_operand.vmem [shape: bf16[16,16], index: 0, kind: input, shape index: {}]
  %s1 = inlined_call_operand.vmem [shape: bf16[16,64], index: 1, kind: input, shape index: {}]
  %s2 = inlined_call_operand.vmem [shape: f32[1,64], index: 2, kind: input, shape index: {}]
  %s3 = inlined_call_operand.vmem [shape: bf16[64,32], index: 3, kind: input, shape index: {}]
  %s4 = inlined_call_operand.vmem [shape: f32[1,32], index: 4, kind: input, shape index: {}]
  %s5 = inlined_call_operand.vmem [shape: bf16[1,32], index: 5, kind: input, shape index: {}]
  %s6 = inlined_call_operand.<no memory space> [shape: f32[1,1], index: 6, kind: input, shape index: {}]
  %s7 = inlined_call_operand.vmem [shape: f32[1,1,16], index: 7, kind: output, shape index: {}]
  %s8 = sld [smem:[#allocation0]]
  $region38: #{house_price_forward.1} parent=0
    _
  %s10 = ssub.s32 1, %s8
  %s11 = scalar_select 0, %s10, %s8
  %12 = sst [smem:[#allocation2]] %s6
  // Predicated region
  $region2: #{house_price_forward.1} parent=0 // pred_check
    _
  $region3: #{house_price_forward.1} parent=0 // pred_check_branch
    %14 = sbr.rel (0) target = $region5
  $region4: #{house_price_forward.1} parent=0 // pred_region
    _
  $region5: #{house_price_forward.1} parent=0 // pred_fallthru
    _
  // Predicated region
  $region6: #{house_price_forward.1} parent=0 // pred_check
    _
  $region7: #{house_price_forward.1} parent=0 // pred_check_branch
    %16 = sbr.rel (0) target = $region9
  $region8: #{house_price_forward.1} parent=0 // pred_region
    _
  $region9: #{house_price_forward.1} parent=0 // pred_fallthru
    _
  // Predicated region
  $region10: #{house_price_forward.1} parent=0 // pred_check
    _
  $region11: #{house_price_forward.1} parent=0 // pred_check_branch
    %18 = sbr.rel (0) target = $region13
  $region12: #{house_price_forward.1} parent=0 // pred_region
    _
  $region13: #{house_price_forward.1} parent=0 // pred_fallthru
    _
  // Predicated region
  $region14: #{house_price_forward.1} parent=0 // pred_check
    _
  $region15: #{house_price_forward.1} parent=0 // pred_check_branch
    %20 = sbr.rel (0) target = $region17
  $region16: #{house_price_forward.1} parent=0 // pred_region
    _
  $region17: #{house_price_forward.1} parent=0 // pred_fallthru
    _
  // Predicated region
  $region18: #{house_price_forward.1} parent=0 // pred_check
    _
  $region19: #{house_price_forward.1} parent=0 // pred_check_branch
    %22 = sbr.rel (0) target = $region21
  $region20: #{house_price_forward.1} parent=0 // pred_region
    _
  $region21: #{house_price_forward.1} parent=0 // pred_fallthru
    _
  // Predicated region
  $region22: #{house_price_forward.1} parent=0 // pred_check
    _
  $region23: #{house_price_forward.1} parent=0 // pred_check_branch
    %24 = sbr.rel (0) target = $region25
  $region24: #{house_price_forward.1} parent=0 // pred_region
    _
  $region25: #{house_price_forward.1} parent=0 // pred_fallthru
    _
  // Predicated region
  $region26: #{house_price_forward.1} parent=0 // pred_check
    _
  $region27: #{house_price_forward.1} parent=0 // pred_check_branch
    %26 = sbr.rel (0) target = $region29
  $region28: #{house_price_forward.1} parent=0 // pred_region
    _
  $region29: #{house_price_forward.1} parent=0 // pred_fallthru
    _
  %v28 = vld [vmem:[%s0] sm:$0xf]
  %v29 = vld [vmem:[%s0 + $0x4] sm:$0xf]
  %v30 = vld [vmem:[%s1] sm:$0xf]
  %v31 = vld [vmem:[%s1 + $0x4] sm:$0xf]
  %v32 = vld [vmem:[%s2] sm:$0x1]
  %v34 = vlaneseq
  %v35 = vshrl.u32 %v34, 7
  %v36 = vsub.s32 0, %v35
  %v37 = vrot.slane %v32, %v36
  %v41 = vunpack.c.l.b16 %v28
  %v42 = vunpack.c.l.b16 %v29
  %v43 = vpack.c.b16 %v42, %v41
  %v46 = vunpack.c.l.b16 %v30
  %v47 = vunpack.c.l.b16 %v31
  %v48 = vpack.c.b16 %v47, %v46
  %vm50 = vcmask 130048
  %v52 = vsel %vm50, %v43, 0
  %54 = vmatprep.subr.bf16.mxu0 0
  %55 = vmatpush1.bf16.msra.mxu0 0
  %56 = vmatprep.subr.bf16.mxu0 0
  %57 = vmatpush1.bf16.msra.mxu0 0
  %58 = vmatprep.subr.bf16.mxu0 0
  %59 = vmatpush1.bf16.msra.mxu0 0
  %60 = vmatprep.subr.bf16.mxu0 0
  %61 = vmatpush1.bf16.msra.mxu0 0
  %62 = vmatprep.subr.bf16.mxu0 0
  %63 = vmatpush1.bf16.msra.mxu0 0
  %64 = vmatprep.subr.bf16.mxu0 0
  %65 = vmatpush1.bf16.msra.mxu0 0
  %66 = vmatprep.subr.bf16.mxu0 0
  %67 = vmatpush1.bf16.msra.mxu0 0
  %68 = vmatprep.subr.bf16.mxu0 0
  %69 = vmatpush1.bf16.msra.mxu0 %v48
  %70 = vmatprep.subr.bf16.mxu0 0
  %71 = vmatpush2.bf16.msra.mxu0 0
  %72 = vmatprep.subr.bf16.mxu0 0
  %73 = vmatpush2.bf16.msra.mxu0 0
  %74 = vmatprep.subr.bf16.mxu0 0
  %75 = vmatpush2.bf16.msra.mxu0 0
  %76 = vmatprep.subr.bf16.mxu0 0
  %77 = vmatpush2.bf16.msra.mxu0 0
  %78 = vmatprep.subr.bf16.mxu0 0
  %79 = vmatpush2.bf16.msra.mxu0 0
  %80 = vmatprep.subr.bf16.mxu0 0
  %81 = vmatpush2.bf16.msra.mxu0 0
  %82 = vmatprep.subr.bf16.mxu0 0
  %83 = vmatpush2.bf16.msra.mxu0 0
  %84 = vmatprep.subr.bf16.mxu0 0
  %85 = vmatpush2.bf16.msra.mxu0 0
  %86 = vmatprep.mubr.bf16.mxu0 0
  %87 = vmatmul.mubr.bf16.gmra.mxu0 %v52
  %v88 = vpop.f32.mrf.mxu0
  %v89 = vadd.f32 %v37, %v88
  %v90 = vpop.f32.mrf.mxu0
  %v91 = vpop.f32.mrf.mxu0
  %v92 = vadd.f32 %v37, %v91
  %v93 = vpop.f32.mrf.mxu0
  %94 = vdwg.mxu0
  %v95 = vmax.f32 %v89, 0.0
  %v96 = vmax.f32 %v92, 0.0
  %v97 = vpack.c.bf16 %v96, %v95
  %v98 = vld [vmem:[%s3] sm:$0xf]
  %v99 = vld [vmem:[%s3 + $0x4] sm:$0xf]
  %v100 = vld [vmem:[%s3 + $0x8] sm:$0xf]
  %v101 = vld [vmem:[%s3 + $0xc] sm:$0xf]
  %v102 = vld [vmem:[%s3 + $0x10] sm:$0xf]
  %v103 = vld [vmem:[%s3 + $0x14] sm:$0xf]
  %v104 = vld [vmem:[%s3 + $0x18] sm:$0xf]
  %v105 = vld [vmem:[%s3 + $0x1c] sm:$0xf]
  %v106 = vld [vmem:[%s4] sm:$0x1]
  %v108 = vlaneseq
  %v109 = vshrl.u32 %v108, 7
  %v110 = vsub.s32 0, %v109
  %v111 = vrot.slane %v106, %v110
  %v121 = vunpack.c.l.b16 %v98
  %v122 = vunpack.c.l.b16 %v99
  %v123 = vunpack.c.l.b16 %v100
  %v124 = vunpack.c.l.b16 %v101
  %v125 = vunpack.c.l.b16 %v102
  %v126 = vunpack.c.l.b16 %v103
  %v127 = vunpack.c.l.b16 %v104
  %v128 = vunpack.c.l.b16 %v105
  %v129 = vpack.c.b16 %v122, %v121
  %v130 = vpack.c.b16 %v124, %v123
  %v131 = vpack.c.b16 %v126, %v125
  %v132 = vpack.c.b16 %v128, %v127
  %vm137 = vcmask 523264
  %v139 = vsel %vm137, %v97, 0
  %141 = vmatprep.subr.bf16.mxu0 0
  %142 = vmatpush1.bf16.msra.mxu0 0
  %143 = vmatprep.subr.bf16.mxu0 0
  %144 = vmatpush1.bf16.msra.mxu0 0
  %145 = vmatprep.subr.bf16.mxu0 0
  %146 = vmatpush1.bf16.msra.mxu0 0
  %147 = vmatprep.subr.bf16.mxu0 0
  %148 = vmatpush1.bf16.msra.mxu0 0
  %149 = vmatprep.subr.bf16.mxu0 0
  %150 = vmatpush1.bf16.msra.mxu0 %v132
  %151 = vmatprep.subr.bf16.mxu0 0
  %152 = vmatpush1.bf16.msra.mxu0 %v131
  %153 = vmatprep.subr.bf16.mxu0 0
  %154 = vmatpush1.bf16.msra.mxu0 %v130
  %155 = vmatprep.subr.bf16.mxu0 0
  %156 = vmatpush1.bf16.msra.mxu0 %v129
  %157 = vmatprep.subr.bf16.mxu0 0
  %158 = vmatpush2.bf16.msra.mxu0 0
  %159 = vmatprep.subr.bf16.mxu0 0
  %160 = vmatpush2.bf16.msra.mxu0 0
  %161 = vmatprep.subr.bf16.mxu0 0
  %162 = vmatpush2.bf16.msra.mxu0 0
  %163 = vmatprep.subr.bf16.mxu0 0
  %164 = vmatpush2.bf16.msra.mxu0 0
  %165 = vmatprep.subr.bf16.mxu0 0
  %166 = vmatpush2.bf16.msra.mxu0 0
  %167 = vmatprep.subr.bf16.mxu0 0
  %168 = vmatpush2.bf16.msra.mxu0 0
  %169 = vmatprep.subr.bf16.mxu0 0
  %170 = vmatpush2.bf16.msra.mxu0 0
  %171 = vmatprep.subr.bf16.mxu0 0
  %172 = vmatpush2.bf16.msra.mxu0 0
  %173 = vmatprep.mubr.bf16.mxu0 0
  %174 = vmatmul.mubr.bf16.gmra.mxu0 %v139
  %v175 = vpop.f32.mrf.mxu0
  %v176 = vadd.f32 %v111, %v175
  %v177 = vpop.f32.mrf.mxu0
  %v178 = vpop.f32.mrf.mxu0
  %v179 = vadd.f32 %v111, %v178
  %v180 = vpop.f32.mrf.mxu0
  %181 = vdwg.mxu0
  %v182 = vmax.f32 %v176, 0.0
  %v183 = vmax.f32 %v179, 0.0
  %v184 = vld [vmem:[%s5] sm:$0x1]
  %v185 = vpack.c.bf16 %v183, %v182
  %s186 = sld [smem:[#allocation2]]
  %v187 = vstv %s186
  %vm188 = vcmask 261120
  %v190 = vsel %vm188, %v184, 0
  %v193 = vsel %vm188, %v185, 0
  %195 = vmatprep.subr.bf16.mxu0 0
  %196 = vmatpush1.bf16.xpose.msra.mxu0 0
  %197 = vmatprep.subr.bf16.mxu0 0
  %198 = vmatpush1.bf16.xpose.msra.mxu0 0
  %199 = vmatprep.subr.bf16.mxu0 0
  %200 = vmatpush1.bf16.xpose.msra.mxu0 0
  %201 = vmatprep.subr.bf16.mxu0 0
  %202 = vmatpush1.bf16.xpose.msra.mxu0 0
  %203 = vmatprep.subr.bf16.mxu0 0
  %204 = vmatpush1.bf16.xpose.msra.mxu0 0
  %205 = vmatprep.subr.bf16.mxu0 0
  %206 = vmatpush1.bf16.xpose.msra.mxu0 0
  %207 = vmatprep.subr.bf16.mxu0 0
  %208 = vmatpush1.bf16.xpose.msra.mxu0 0
  %209 = vmatprep.subr.bf16.mxu0 0
  %210 = vmatpush1.bf16.xpose.msra.mxu0 %v193
  %211 = vmatprep.subr.bf16.mxu0 0
  %212 = vmatpush2.bf16.xpose.msra.mxu0 0
  %213 = vmatprep.subr.bf16.mxu0 0
  %214 = vmatpush2.bf16.xpose.msra.mxu0 0
  %215 = vmatprep.subr.bf16.mxu0 0
  %216 = vmatpush2.bf16.xpose.msra.mxu0 0
  %217 = vmatprep.subr.bf16.mxu0 0
  %218 = vmatpush2.bf16.xpose.msra.mxu0 0
  %219 = vmatprep.subr.bf16.mxu0 0
  %220 = vmatpush2.bf16.xpose.msra.mxu0 0
  %221 = vmatprep.subr.bf16.mxu0 0
  %222 = vmatpush2.bf16.xpose.msra.mxu0 0
  %223 = vmatprep.subr.bf16.mxu0 0
  %224 = vmatpush2.bf16.xpose.msra.mxu0 0
  %225 = vmatprep.subr.bf16.mxu0 0
  %226 = vmatpush2.bf16.xpose.msra.mxu0 0
  %227 = vmatprep.mubr.bf16.mxu0 0
  %228 = vmatmul.mubr.bf16.gmra.mxu0 %v190
  %v229 = vpop.f32.mrf.mxu0
  %v230 = vadd.f32 %v187, %v229
  %v231 = vpop.f32.mrf.mxu0
  %v232 = vpop.f32.mrf.mxu0
  %v233 = vpop.f32.mrf.mxu0
  %234 = vdwg.mxu0
  %vm235 = vcmask 122880
  %236 = vst.msk [vmem:[%s7] sm:$0x1] %vm235, %v230
  // Predicated region
  $region30: #{house_price_forward.1} parent=0 // pred_check
    _
  $region31: #{house_price_forward.1} parent=0 // pred_check_branch
    %238 = sbr.rel (0) target = $region33
  $region32: #{house_price_forward.1} parent=0 // pred_region
    _
  $region33: #{house_price_forward.1} parent=0 // pred_fallthru
    _
  // Predicated region
  $region34: #{house_price_forward.1} parent=0 // pred_check
    _
  $region35: #{house_price_forward.1} parent=0 // pred_check_branch
    %240 = sbr.rel (0) target = $region37
  $region36: #{house_price_forward.1} parent=0 // pred_region
    _
  $region37: #{house_price_forward.1} parent=0 // pred_fallthru
    _

</llo_original>
